<compile_context>
chip_gen: v5e
topology: v5e:2x2
jax: 0.10.0
libtpu: 0.0.40
codegen_flags: <defaults>
</compile_context>

<pallas_src>
import jax
import jax.numpy as jnp
from jax.experimental import pallas as pl
from jax.experimental.pallas import tpu as pltpu


def _embed_kernel(gid_ref, table_ref, out_ref):
    """gid_ref:   (TNQ, PACK) int32  adjusted global row ids (-1 => zero row)
       table_ref: (PACK*V, PACK*D)   block-diagonal combined embedding table
       out_ref:   (TNQ, PACK*D)      lane-dense packed output rows
    """
    tnq, pack = gid_ref.shape
    pv = table_ref.shape[0]
    iota = jax.lax.broadcasted_iota(jnp.int32, (tnq, pv), 1)
    # Packed slot j's ids live in the disjoint column range [j*V, (j+1)*V), so
    # OR-ing the per-slot hits is exact; id == -1 matches nothing -> zero row.
    # Boolean compares + ORs + a single final cast keep VPU work minimal.
    hit = gid_ref[:, pl.ds(0, 1)] == iota
    for j in range(1, pack):                      # static unroll, PACK is tiny
        hit = jnp.logical_or(hit, gid_ref[:, pl.ds(j, 1)] == iota)
    mh = hit.astype(table_ref.dtype)
    out_ref[...] = jnp.dot(
        mh, table_ref[...], preferred_element_type=jnp.float32
    ).astype(out_ref.dtype)


def make_embedder(block_masks, tables, *, max_row_tile=4096,
                  table_dtype=jnp.float32, out_dtype=jnp.float32,
                  vmem_budget_bytes=None):
    """block_masks: list of (block_size,) bool arrays; tables: list of
    (vocab_i, D) float32 embedding weights.  Returns
    forward(tokens, num_steps, prev_steps) -> (B, T, D)."""
    assert len(block_masks) == len(tables) and len(tables) > 0
    block_size = int(block_masks[0].shape[0])
    D = int(tables[0].shape[1])
    assert all(int(t.shape[1]) == D for t in tables)

    # --- generation-aware VMEM budget (computed once) ------------------------
    phys_vmem = 64 * 1024 * 1024          # conservative default: v7x 64 MiB/TC
    try:
        cap = getattr(pltpu.get_tpu_info(), "vmem_capacity_bytes", None)
        if cap:
            phys_vmem = int(cap)
    except Exception:
        pass
    if vmem_budget_bytes is None:
        vmem_budget_bytes = phys_vmem // 2   # 32 MiB on v7x, 64 MiB on v5e/v6e

    # --- static glue, computed once (hoisted out of the per-call path) -------
    masks = jnp.stack([jnp.asarray(m).astype(jnp.int32) for m in block_masks], 0)
    # Exactly one table must own each block slot (mirrors the module's
    # `(sum(block_masks) == 1).all()`).
    assert bool(jnp.all(jnp.sum(masks, axis=0) == 1)), \
        "every block position must be owned by exactly one block_mask"
    slot_table_id = jnp.argmax(masks, axis=0).astype(jnp.int32)   # (block_size,)

    sizes = [int(t.shape[0]) for t in tables]
    offs = [0]
    for s in sizes[:-1]:
        offs.append(offs[-1] + s)
    offsets = jnp.asarray(offs, jnp.int32)                        # (n_tables,)
    sizes_arr = jnp.asarray(sizes, jnp.int32)                     # (n_tables,)

    # table_dtype=bfloat16 is an opt-in (selection stays exact, weights round).
    combined = jnp.concatenate([jnp.asarray(t, table_dtype) for t in tables], 0)
    V = int(combined.shape[0])
    t_isz = jnp.dtype(table_dtype).itemsize
    o_isz = jnp.dtype(out_dtype).itemsize

    # Lane-dense packing factor: fold PACK = 128 // D logical rows per 128-lane
    # output row.  TODO(synk): allow pack up to 256 // D on v6e/v7x (2x256 MXU)
    # once the per-slot accumulator variant lands.
    pack = 128 // D if (D < 128 and 128 % D == 0) else 1
    while pack > 1 and (pack * V) * (pack * D) * t_isz > vmem_budget_bytes // 4:
        pack //= 2
    quantum = pack * 8                      # row_tile granularity (sublane = 8)

    if pack == 1:
        table_bd = combined
    else:
        table_bd = jnp.zeros((pack * V, pack * D), table_dtype)
        for j in range(pack):
            table_bd = table_bd.at[j * V:(j + 1) * V, j * D:(j + 1) * D].set(combined)

    # The table never changes across grid steps (index_map == (0,0)), so
    # single-buffer it once it's big enough to matter; tiny tables keep the
    # default (most battle-tested) double-buffered path.
    table_bytes_single = (pack * V) * (pack * D) * t_isz
    single_buffer_table = table_bytes_single > (1 << 20)
    table_resident = table_bytes_single * (1 if single_buffer_table else 2)
    table_spec_kwargs = ({"pipeline_mode": pl.Buffered(1)}
                         if single_buffer_table else {})

    # Per-output-row VMEM: id block + output block (double-buffered) plus the
    # multi-hot temporary (with headroom for the bool intermediate).
    per_row = 2 * 4 + 2 * D * o_isz + 2 * V * t_isz
    slack = 2 << 20
    avail = vmem_budget_bytes - table_resident - slack
    if avail < quantum * per_row:
        # TODO(synk): HBM-resident table + DMA row gather for large vocabs.
        raise NotImplementedError(
            f"combined embedding table too large for the VMEM-resident MXU "
            f"path ({table_resident} B table vs {vmem_budget_bytes} B budget)")
    budget_rows = max(quantum, (avail // per_row) // quantum * quantum)
    row_cap = max(quantum, min((int(max_row_tile) // quantum) * quantum,
                               budget_rows))

    def _select_row_tile(n_rows):
        # Big tiles amortize the ~0.35us per-grid-step overhead, but keep at
        # least 2 grid steps when there is enough work so ("parallel",) can
        # shard across v7x's two TensorCores (no effect on v5e/v6e).
        if n_rows <= quantum:
            return quantum
        half = -(-n_rows // 2)
        half = -(-half // quantum) * quantum
        return min(row_cap, half)

    def _forward(tokens, num_steps, prev_steps):
        assert tokens.ndim == 2
        B, T = tokens.shape
        N = B * T
        tn = _select_row_tile(N)
        n_pad = -(-N // tn) * tn

        prev = jnp.asarray(prev_steps, jnp.int32)   # dynamic -> no retrace
        nstp = jnp.asarray(num_steps, jnp.int32)

        pos = (jnp.arange(T, dtype=jnp.int32) + prev) % block_size
        tid = slot_table_id[pos]                                   # (T,)
        # Clamp each token to its owning table's vocab so out-of-range ids can
        # never read a different table's rows.
        tok = jnp.clip(tokens.astype(jnp.int32), 0, (sizes_arr[tid] - 1)[None, :])
        gid = offsets[tid][None, :] + tok                          # (B, T)
        valid = (jnp.arange(T, dtype=jnp.int32) < nstp)[None, :]
        gid = jnp.where(valid, gid, -1)

        gid_flat = gid.reshape(N)
        if n_pad > N:                                              # pad -> zero rows
            gid_flat = jnp.concatenate(
                [gid_flat, jnp.full((n_pad - N,), -1, jnp.int32)])
        # Shift each packed slot's ids into its own block-diagonal column range.
        j_off = (jnp.arange(n_pad, dtype=jnp.int32) % pack) * V
        gid_adj = jnp.where(gid_flat >= 0, gid_flat + j_off, -1)
        gid2d = gid_adj.reshape(n_pad // pack, pack)

        resident = (table_resident + 2 * tn * 4 + 2 * tn * D * o_isz
                    + 2 * tn * V * t_isz + slack)
        cp_kwargs = dict(dimension_semantics=("parallel",))
        if resident > 12 * 1024 * 1024:
            # Raise the scoped limit whenever past v5e's 16 MiB default window;
            # cap 16 MiB below the physical ceiling (<= 48 MiB on v7x).
            limit = max(resident + (2 << 20), resident * 5 // 4)
            cp_kwargs["vmem_limit_bytes"] = int(min(limit, phys_vmem - (16 << 20)))
        compiler_params = pltpu.CompilerParams(**cp_kwargs)

        out_packed = pl.pallas_call(
            _embed_kernel,
            out_shape=jax.ShapeDtypeStruct((n_pad // pack, pack * D), out_dtype),
            grid_spec=pltpu.PrefetchScalarGridSpec(
                num_scalar_prefetch=0,
                grid=(n_pad // tn,),
                in_specs=[
                    pl.BlockSpec((tn // pack, pack), lambda i: (i, 0)),
                    pl.BlockSpec((pack * V, pack * D), lambda i: (0, 0),
                                 **table_spec_kwargs),
                ],
                out_specs=pl.BlockSpec((tn // pack, pack * D), lambda i: (i, 0)),
            ),
            compiler_params=compiler_params,
        )(gid2d, table_bd)

        return out_packed.reshape(n_pad, D)[:N].reshape(B, T, D)

    # NOTE: no static_argnums -- num_steps / prev_steps are dynamic scalars, so
    # changing them between calls does not trigger retracing / recompilation.
    return jax.jit(_forward)


if __name__ == "__main__":
    key = jax.random.PRNGKey(0)

    # small shapes consistent with the module
    B, D = 2, 32
    block_size, max_blocks = 4, 2
    T = block_size * max_blocks
    vocab_obs, vocab_act = 16, 4
    num_steps, prev_steps = T, 0

    # block masks: obs owns all slots except the last; act owns the last slot
    obs_mask = jnp.array([1, 1, 1, 0], dtype=bool)
    act_mask = jnp.array([0, 0, 0, 1], dtype=bool)

    k1, k2, k3, k4, k5, k6 = jax.random.split(key, 6)
    obs_table = jax.random.normal(k1, (vocab_obs, D), jnp.float32)
    act_table = jax.random.normal(k2, (vocab_act, D), jnp.float32)

    forward = make_embedder([obs_mask, act_mask], [obs_table, act_table])

    # ---- test 1: full sequence, prev_steps = 0 ----
    pos = jnp.arange(T) % block_size
    is_act = act_mask[pos]
    tok_act = jax.random.randint(k3, (B, T), 0, vocab_act)
    tok_obs = jax.random.randint(k4, (B, T), 0, vocab_obs)
    tokens = jnp.where(is_act[None, :], tok_act, tok_obs).astype(jnp.int32)

    out = jax.block_until_ready(forward(tokens, num_steps, prev_steps))

    ref = jnp.where(is_act[None, :, None],
                    act_table[jnp.clip(tokens, 0, vocab_act - 1)],
                    obs_table[jnp.clip(tokens, 0, vocab_obs - 1)])
    ref = ref * (jnp.arange(T)[None, :, None] < num_steps)
    assert out.shape == (B, T, D)
    assert jnp.allclose(out, ref, atol=1e-5), "mismatch vs reference (test 1)"

    # ---- test 2: prev_steps > 0, num_steps < T (masking + padding; new
    #      prev/num values reuse the same trace because they are dynamic) ----
    T2, prev2, nsteps2 = 5, 3, 4
    pos2 = (jnp.arange(T2) + prev2) % block_size
    is_act2 = act_mask[pos2]
    tok_act2 = jax.random.randint(k5, (B, T2), 0, vocab_act)
    tok_obs2 = jax.random.randint(k6, (B, T2), 0, vocab_obs)
    tokens2 = jnp.where(is_act2[None, :], tok_act2, tok_obs2).astype(jnp.int32)

    out2 = jax.block_until_ready(forward(tokens2, nsteps2, prev2))

    ref2 = jnp.where(is_act2[None, :, None],
                     act_table[jnp.clip(tokens2, 0, vocab_act - 1)],
                     obs_table[jnp.clip(tokens2, 0, vocab_obs - 1)])
    ref2 = ref2 * (jnp.arange(T2)[None, :, None] < nsteps2)
    assert out2.shape == (B, T2, D)
    assert jnp.allclose(out2, ref2, atol=1e-5), "mismatch vs reference (test 2)"

    print("KERNEL_OK")
</pallas_src>

<mosaic_0001>
module attributes {stable_mosaic.version = 11 : i64} {
  func.func @_embed_kernel(%arg0: i32, %arg1: memref<8x4xi32, #tpu.memory_space<vmem>>, %arg2: memref<80x128xf32, #tpu.memory_space<vmem>>, %arg3: memref<8x128xf32, #tpu.memory_space<vmem>>) attributes {dimension_semantics = [#tpu.dimension_semantics<parallel>], iteration_bounds = array<i64: 1>, scalar_prefetch = 0 : i64, scratch_operands = 0 : i64, tpu.core_type = #tpu.core_type<tc>, window_params = [{transform_indices = @transform_0, window_bounds = array<i64: 8, 4>}, {pipeline_mode = #tpu.pipeline_mode<synchronous>, transform_indices = @transform_1, window_bounds = array<i64: 80, 128>}, {transform_indices = @transform_2, window_bounds = array<i64: 8, 128>}]} {
    %0 = tpu.iota {dimensions = array<i32: 1>} : vector<8x80xi32>
    %c0 = arith.constant 0 : index
    %c0_0 = arith.constant 0 : index
    %1 = vector.load %arg1[%c0, %c0_0] : memref<8x4xi32, #tpu.memory_space<vmem>>, vector<8x1xi32>
    %2 = vector.broadcast %1 : vector<8x1xi32> to vector<8x80xi32>
    %3 = arith.cmpi eq, %2, %0 : vector<8x80xi32>
    %c0_1 = arith.constant 0 : index
    %c1 = arith.constant 1 : index
    %4 = vector.load %arg1[%c0_1, %c1] : memref<8x4xi32, #tpu.memory_space<vmem>>, vector<8x1xi32>
    %5 = vector.broadcast %4 : vector<8x1xi32> to vector<8x80xi32>
    %6 = arith.cmpi eq, %5, %0 : vector<8x80xi32>
    %7 = arith.ori %3, %6 : vector<8x80xi1>
    %c0_2 = arith.constant 0 : index
    %c2 = arith.constant 2 : index
    %8 = vector.load %arg1[%c0_2, %c2] : memref<8x4xi32, #tpu.memory_space<vmem>>, vector<8x1xi32>
    %9 = vector.broadcast %8 : vector<8x1xi32> to vector<8x80xi32>
    %10 = arith.cmpi eq, %9, %0 : vector<8x80xi32>
    %11 = arith.ori %7, %10 : vector<8x80xi1>
    %c0_3 = arith.constant 0 : index
    %c3 = arith.constant 3 : index
    %12 = vector.load %arg1[%c0_3, %c3] : memref<8x4xi32, #tpu.memory_space<vmem>>, vector<8x1xi32>
    %13 = vector.broadcast %12 : vector<8x1xi32> to vector<8x80xi32>
    %14 = arith.cmpi eq, %13, %0 : vector<8x80xi32>
    %15 = arith.ori %11, %14 : vector<8x80xi1>
    %16 = arith.extui %15 : vector<8x80xi1> to vector<8x80xi32>
    %17 = arith.sitofp %16 : vector<8x80xi32> to vector<8x80xf32>
    %c0_4 = arith.constant 0 : index
    %c0_5 = arith.constant 0 : index
    %18 = vector.load %arg2[%c0_4, %c0_5] : memref<80x128xf32, #tpu.memory_space<vmem>>, vector<80x128xf32>
    %cst = arith.constant dense<0.000000e+00> : vector<8x128xf32>
    %19 = tpu.matmul %17, %18, %cst {dimension_numbers = #tpu.dot_dimension_numbers<[1], [0], [0], [1], [0, 0, 1, 1], [], []>} : vector<8x80xf32>, vector<80x128xf32>, vector<8x128xf32> -> vector<8x128xf32>
    %c0_6 = arith.constant 0 : index
    %c0_7 = arith.constant 0 : index
    %20 = vector.load %arg3[%c0_6, %c0_7] : memref<8x128xf32, #tpu.memory_space<vmem>>, vector<8x128xf32>
    tpu.vector_store %arg3[%c0_6, %c0_7], %19 {strides = array<i32>} : memref<8x128xf32, #tpu.memory_space<vmem>>, vector<8x128xf32>,
    return
  }
  func.func @transform_0(%arg0: i32) -> (i32, i32) {
    %c0_i32 = arith.constant 0 : i32
    %c0_i32_0 = arith.constant 0 : i32
    return %arg0, %c0_i32 : i32, i32
  }
  func.func @transform_1(%arg0: i32) -> (i32, i32) {
    %c0_i32 = arith.constant 0 : i32
    %c0_i32_0 = arith.constant 0 : i32
    %c0_i32_1 = arith.constant 0 : i32
    return %c0_i32, %c0_i32_0 : i32, i32
  }
  func.func @transform_2(%arg0: i32) -> (i32, i32) {
    %c0_i32 = arith.constant 0 : i32
    %c0_i32_0 = arith.constant 0 : i32
    return %arg0, %c0_i32 : i32, i32
  }
}

</mosaic_0001>

<llo_original>
// kernel: _forward.1
$region0: #{_forward.1}
  #allocation0 [shape = 'u32[]', space=smem, size = 0x4, offset = 0x4, fixed_abs, tag = 'smem constant byte address 0x4 - core index']
  #allocation1 [shape = 'u32[72,128]{1,0:T(1,128)}', space=vmem, size = 0x9000, scoped, tag = 'internal scratch']
  %s0 = inlined_call_operand.vmem [shape: s32[8,4], index: 0, kind: input, shape index: {}]
  %s1 = inlined_call_operand.vmem [shape: f32[80,128], index: 1, kind: input, shape index: {}]
  %s2 = inlined_call_operand.vmem [shape: f32[8,128], index: 2, kind: output, shape index: {}]
  %s3 = sld [smem:[#allocation0]]
  $region18: #{_forward.1} parent=0
    _
  %s5 = ssub.s32 1, %s3
  %s6 = scalar_select 0, %s5, %s3
  // Predicated region
  $region2: #{_forward.1} parent=0 // pred_check
    _
  $region3: #{_forward.1} parent=0 // pred_check_branch
    %8 = sbr.rel (0) target = $region5
  $region4: #{_forward.1} parent=0 // pred_region
    _
  $region5: #{_forward.1} parent=0 // pred_fallthru
    _
  // Predicated region
  $region6: #{_forward.1} parent=0 // pred_check
    _
  $region7: #{_forward.1} parent=0 // pred_check_branch
    %10 = sbr.rel (0) target = $region9
  $region8: #{_forward.1} parent=0 // pred_region
    _
  $region9: #{_forward.1} parent=0 // pred_fallthru
    _
  %v11 = vlaneseq
  %v12 = vand.u32 %v11, 127
  %v13 = vld [vmem:[%s0] sm:$0xff]
  %14 = vset.pattern.permute.xlu0 0
  %15 = vperm.xlu0 %14, %v13
  %v16 = vpop.permute.xlu0 %15
  %vm17 = vcmp.eq.s32.totalorder %v16, %v12
  %18 = vset.pattern.permute.xlu0 1
  %19 = vperm.xlu0 %18, %v13
  %v20 = vpop.permute.xlu0 %19
  %vm21 = vcmp.eq.s32.totalorder %v20, %v12
  %vm22 = vmor %vm17, %vm21
  %23 = vset.pattern.permute.xlu0 2
  %24 = vperm.xlu0 %23, %v13
  %v25 = vpop.permute.xlu0 %24
  %vm26 = vcmp.eq.s32.totalorder %v25, %v12
  %vm27 = vmor %vm22, %vm26
  %28 = vset.pattern.permute.xlu0 3
  %29 = vperm.xlu0 %28, %v13
  %v30 = vpop.permute.xlu0 %29
  %vm31 = vcmp.eq.s32.totalorder %v30, %v12
  %vm32 = vmor %vm27, %vm31
  %v33 = vsel %vm32, 1, 0
  %v34 = vcvt.s32.f32 %v33
  %v35 = vld [vmem:[%s1] sm:$0xff]
  %v36 = vld [vmem:[%s1 + $0x8] sm:$0xff]
  %v37 = vld [vmem:[%s1 + $0x10] sm:$0xff]
  %v38 = vld [vmem:[%s1 + $0x18] sm:$0xff]
  %v39 = vld [vmem:[%s1 + $0x20] sm:$0xff]
  %v40 = vld [vmem:[%s1 + $0x28] sm:$0xff]
  %v41 = vld [vmem:[%s1 + $0x30] sm:$0xff]
  %v42 = vld [vmem:[%s1 + $0x38] sm:$0xff]
  %v43 = vld [vmem:[%s1 + $0x40] sm:$0xff]
  %v44 = vld [vmem:[%s1 + $0x48] sm:$0xff]
  %vm45 = vcmask 654336
  %v47 = vsel %vm45, %v34, 0
  %49 = vmatpush.msra.mxu0 0.0
  %50 = vmatpush.msra.mxu0 0.0
  %51 = vmatpush.msra.mxu0 0.0
  %52 = vmatpush.msra.mxu0 0.0
  %53 = vmatpush.msra.mxu0 0.0
  %54 = vmatpush.msra.mxu0 0.0
  %55 = vmatpush.msra.mxu0 %v44
  %56 = vmatpush.msra.mxu0 %v43
  %57 = vmatpush.msra.mxu0 %v42
  %58 = vmatpush.msra.mxu0 %v41
  %59 = vmatpush.msra.mxu0 %v40
  %60 = vmatpush.msra.mxu0 %v39
  %61 = vmatpush.msra.mxu0 %v38
  %62 = vmatpush.msra.mxu0 %v37
  %63 = vmatpush.msra.mxu0 %v36
  %64 = vmatpush.msra.mxu0 %v35
  %65 = vmatmul.f32.gmra.mxu0 %v47
  %v66 = vpop.f32.mrf.mxu0
  %v67 = vadd.f32 0.0, %v66
  %68 = vdwg.mxu0
  %69 = vst [vmem:[%s2] sm:$0xff] %v67
  // Predicated region
  $region10: #{_forward.1} parent=0 // pred_check
    _
  $region11: #{_forward.1} parent=0 // pred_check_branch
    %71 = sbr.rel (0) target = $region13
  $region12: #{_forward.1} parent=0 // pred_region
    _
  $region13: #{_forward.1} parent=0 // pred_fallthru
    _
  // Predicated region
  $region14: #{_forward.1} parent=0 // pred_check
    _
  $region15: #{_forward.1} parent=0 // pred_check_branch
    %73 = sbr.rel (0) target = $region17
  $region16: #{_forward.1} parent=0 // pred_region
    _
  $region17: #{_forward.1} parent=0 // pred_fallthru
    _

</llo_original>
